<compile_context>
chip_gen: v7x
topology: tpu7x:2x2x1
jax: 0.10.0
libtpu: 0.0.40
codegen_flags: <defaults>
</compile_context>

<pallas_src>
import functools

import jax
import jax.numpy as jnp
from jax.experimental import pallas as pl
from jax.experimental.pallas import tpu as pltpu

LANE = 128        # TPU lane width: per-head output columns are padded to this
ROW_ALIGN = 16    # bf16 sublane packing for the x operand


def _round_up(a, b):
    return (a + b - 1) // b * b


def _cdiv(a, b):
    return (a + b - 1) // b


def s2encoder_kernel(
    x_ref,     # (T, I)      bf16 : flattened input rows
    eps_ref,   # (T, OP)     f32  : reparameterize noise (lane-padded)
    ew_ref,    # (I, H)      bf16 : embed weight
    eb_ref,    # (1, H)      f32  : embed bias
    fw_ref,    # (L, H, H)   bf16 : stacked fc weights
    fb_ref,    # (L, 1, H)   f32  : stacked fc biases
    hwx_ref,   # (I, 2*OP)   bf16 : fused [mu | logvar] head weight, x rows
    hwh_ref,   # (H, 2*OP)   bf16 : fused [mu | logvar] head weight, h rows
    hb_ref,    # (1, 2*OP)   f32  : fused head bias
    out_ref,   # (T, 4*OP)   f32  : [mu | s_var | logvar | z], lane-padded
    *,
    n_layers: int,
    out_pad: int,
):
    OP = out_pad
    x_lo = x_ref[...]                                   # (T, I) bf16

    # embedded = embed(x)
    h = jnp.dot(x_lo, ew_ref[...], preferred_element_type=jnp.float32) + eb_ref[...]

    # hidden stack: h = relu(fc[i](h))
    # (static Python loop is fine for small L; switch to lax.fori_loop(unroll=True)
    #  or a layer grid axis once n_layers grows, to bound live ranges.)
    for i in range(n_layers):
        h = jnp.dot(h.astype(jnp.bfloat16), fw_ref[i],
                    preferred_element_type=jnp.float32) + fb_ref[i]
        h = jnp.maximum(h, 0.0)

    # fused heads, K-dim split (no lane concat):
    #   [mu | logvar] = x @ Wx + h @ Wh + b        (each dot is one MXU pass)
    head = jnp.dot(x_lo, hwx_ref[...], preferred_element_type=jnp.float32)
    head = head + jnp.dot(h.astype(jnp.bfloat16), hwh_ref[...],
                          preferred_element_type=jnp.float32)
    head = head + hb_ref[...]
    mu = head[:, :OP]          # 128-aligned slice
    logvar = head[:, OP:]      # 128-aligned slice

    # reparameterize (f32 epilogue; v5e has no bf16 VPU/EUP):
    #   s_var = exp(0.5*logvar); z = eps * s_var + mu
    s_var = jnp.exp(0.5 * logvar)
    z = eps_ref[...] * s_var + mu

    # lane-dense, 128-aligned static-slice writeback -> unmasked full stores
    out_ref[:, 0 * OP:1 * OP] = mu
    out_ref[:, 1 * OP:2 * OP] = s_var
    out_ref[:, 2 * OP:3 * OP] = logvar
    out_ref[:, 3 * OP:4 * OP] = z


def s2encoder_forward(x_flat, eps, params, *, n_layers):
    """Returns (mu, s_var, logvar, z), each (N, output_size) f32."""
    n, input_size = x_flat.shape
    output_size = eps.shape[-1]
    hidden_size = params["embed_w"].shape[-1]
    out_pad = params["head_b"].shape[-1] // 2      # lane-padded per-head width (128)

    # Row tiling: up to 512 rows per tile (>=85% HBM roofline per tiled-add
    # data), but never more than ceil(N/2) so a moderate batch still yields a
    # grid of >= 2 "parallel" steps and both v7x TensorCores get work.
    n_pad0 = _round_up(n, ROW_ALIGN)
    tile_n = min(512, _round_up(_cdiv(n_pad0, 2), ROW_ALIGN))
    tile_n = max(ROW_ALIGN, min(tile_n, n_pad0))
    n_pad = _round_up(n, tile_n)
    grid = (n_pad // tile_n,)

    # Separate operands: x in bf16 (halves its DMA bytes), eps lane-padded f32.
    x_p = jnp.pad(x_flat.astype(jnp.float32),
                  ((0, n_pad - n), (0, 0))).astype(jnp.bfloat16)
    eps_p = jnp.pad(eps.astype(jnp.float32),
                    ((0, n_pad - n), (0, out_pad - output_size)))

    o4 = 4 * out_pad

    # Advisory cost estimate so XLA schedules neighbors around this small kernel.
    flops = 2 * n_pad * (input_size * hidden_size
                         + n_layers * hidden_size * hidden_size
                         + (input_size + hidden_size) * 2 * out_pad)
    bytes_accessed = (
        x_p.size * 2 + eps_p.size * 4                               # inputs
        + (params["embed_w"].size + params["fc_w"].size
           + params["head_wx"].size + params["head_wh"].size) * 2   # bf16 weights
        + (params["embed_b"].size + params["fc_b"].size
           + params["head_b"].size) * 4                             # f32 biases
        + n_pad * o4 * 4                                            # output slab
    )
    cost = pl.CostEstimate(flops=flops,
                           transcendentals=n_pad * out_pad,
                           bytes_accessed=bytes_accessed)

    # Weights use constant index_maps and stay VMEM-resident across grid steps.
    # For production hidden sizes (L*H*H bf16 in the tens of MiB), single-buffer
    # them, e.g.:
    #   pl.BlockSpec(params["fc_w"].shape, lambda i: (0, 0, 0),
    #                pipeline_mode=pl.Buffered(1))
    # or stream one layer per grid step ("arbitrary" layer axis) to fit v7x's
    # 64 MiB VMEM. Unnecessary at these toy sizes.
    out = pl.pallas_call(
        functools.partial(
            s2encoder_kernel,
            n_layers=n_layers,
            out_pad=out_pad,
        ),
        out_shape=jax.ShapeDtypeStruct((n_pad, o4), jnp.float32),
        grid=grid,
        in_specs=[
            pl.BlockSpec((tile_n, input_size), lambda i: (i, 0)),
            pl.BlockSpec((tile_n, out_pad), lambda i: (i, 0)),
            pl.BlockSpec(params["embed_w"].shape, lambda i: (0, 0)),
            pl.BlockSpec(params["embed_b"].shape, lambda i: (0, 0)),
            pl.BlockSpec(params["fc_w"].shape, lambda i: (0, 0, 0)),
            pl.BlockSpec(params["fc_b"].shape, lambda i: (0, 0, 0)),
            pl.BlockSpec(params["head_wx"].shape, lambda i: (0, 0)),
            pl.BlockSpec(params["head_wh"].shape, lambda i: (0, 0)),
            pl.BlockSpec(params["head_b"].shape, lambda i: (0, 0)),
        ],
        out_specs=pl.BlockSpec((tile_n, o4), lambda i: (i, 0)),
        compiler_params=pltpu.CompilerParams(
            dimension_semantics=("parallel",),
            vmem_limit_bytes=64 * 1024 * 1024,
        ),
        cost_estimate=cost,
    )(
        x_p, eps_p,
        params["embed_w"], params["embed_b"],
        params["fc_w"], params["fc_b"],
        params["head_wx"], params["head_wh"], params["head_b"],
    )

    out = out[:n]
    o, OP = output_size, out_pad
    mu = out[:, 0 * OP:0 * OP + o]
    s_var = out[:, 1 * OP:1 * OP + o]
    logvar = out[:, 2 * OP:2 * OP + o]
    z = out[:, 3 * OP:3 * OP + o]
    return mu, s_var, logvar, z


def init_params(key, input_size, output_size, hidden_size, n_layers):
    """Deterministic synthetic init (uniform, PyTorch-Linear-like bounds)."""
    def linear(k, fan_in, fan_out):
        k1, k2 = jax.random.split(k)
        bound = 1.0 / jnp.sqrt(fan_in)
        w = jax.random.uniform(k1, (fan_in, fan_out), jnp.float32, -bound, bound)
        b = jax.random.uniform(k2, (1, fan_out), jnp.float32, -bound, bound)
        return w, b

    keys = jax.random.split(key, 3 + n_layers)
    ew, eb = linear(keys[0], input_size, hidden_size)

    fws, fbs = [], []
    for i in range(n_layers):
        w, b = linear(keys[1 + i], hidden_size, hidden_size)
        fws.append(w)
        fbs.append(b[None])                              # (1, 1, H)
    fc_w = jnp.stack(fws, axis=0)                        # (L, H, H)
    fc_b = jnp.concatenate(fbs, axis=0)                  # (L, 1, H)

    # Heads: fused [mu | logvar], zero-padded to 128 output lanes per head,
    # and split along K into the x rows and h rows (so the kernel never
    # concatenates along the lane axis).
    out_pad = _round_up(output_size, LANE)
    mu_w, mu_b = linear(keys[1 + n_layers], input_size + hidden_size, output_size)
    lv_w, lv_b = linear(keys[2 + n_layers], input_size + hidden_size, output_size)

    def pad_cols(a):
        return jnp.pad(a, ((0, 0), (0, out_pad - output_size)))

    head_wx = jnp.concatenate(
        [pad_cols(mu_w[:input_size]), pad_cols(lv_w[:input_size])], axis=1)  # (I, 2*OP)
    head_wh = jnp.concatenate(
        [pad_cols(mu_w[input_size:]), pad_cols(lv_w[input_size:])], axis=1)  # (H, 2*OP)
    head_b = jnp.concatenate([pad_cols(mu_b), pad_cols(lv_b)], axis=1)       # (1, 2*OP)

    return {
        "embed_w": ew.astype(jnp.bfloat16), "embed_b": eb,
        "fc_w": fc_w.astype(jnp.bfloat16), "fc_b": fc_b,
        "head_wx": head_wx.astype(jnp.bfloat16),
        "head_wh": head_wh.astype(jnp.bfloat16),
        "head_b": head_b,
    }


def reference(x_flat, eps, p, n_layers, output_size):
    """Plain-JAX reference using the same bf16 weights / f32 accumulation."""
    bf = jnp.bfloat16
    h = jnp.dot(x_flat.astype(bf), p["embed_w"],
                preferred_element_type=jnp.float32) + p["embed_b"]
    for i in range(n_layers):
        h = jnp.dot(h.astype(bf), p["fc_w"][i],
                    preferred_element_type=jnp.float32) + p["fc_b"][i]
        h = jnp.maximum(h, 0.0)
    head = (jnp.dot(x_flat.astype(bf), p["head_wx"], preferred_element_type=jnp.float32)
            + jnp.dot(h.astype(bf), p["head_wh"], preferred_element_type=jnp.float32)
            + p["head_b"])
    OP = p["head_b"].shape[-1] // 2
    mu = head[:, :output_size]
    lv = head[:, OP:OP + output_size]
    sv = jnp.exp(0.5 * lv)
    z = eps * sv + mu
    return mu, sv, lv, z


if __name__ == "__main__":
    input_size, output_size, hidden_size, n_layers, batch_size = 16, 16, 32, 2, 8

    key = jax.random.PRNGKey(0)
    k_param, k_x, k_eps = jax.random.split(key, 3)

    # inputs as in the PyTorch module: any leading shape, flattened to (-1, input_size)
    x = jax.random.normal(k_x, (2, 4, input_size), jnp.float32)
    x_flat = x.reshape(-1, input_size)                       # (8, 16)

    params = init_params(k_param, input_size, output_size, hidden_size, n_layers)
    # TODO(synk): reparameterize noise is drawn host-side (torch used in-module RNG).
    eps = jax.random.normal(k_eps, (x_flat.shape[0], output_size), jnp.float32)

    mu, s_var, logvar, z = s2encoder_forward(x_flat, eps, params, n_layers=n_layers)
    jax.block_until_ready((mu, s_var, logvar, z))

    mu_r, sv_r, lv_r, z_r = reference(x_flat, eps, params, n_layers, output_size)

    assert jnp.allclose(mu, mu_r, atol=1e-3, rtol=1e-3)
    assert jnp.allclose(logvar, lv_r, atol=1e-3, rtol=1e-3)
    assert jnp.allclose(s_var, sv_r, atol=1e-3, rtol=1e-3)
    assert jnp.allclose(z, z_r, atol=1e-3, rtol=1e-3)

    print("KERNEL_OK")
</pallas_src>

<mosaic_0001>
module attributes {stable_mosaic.version = 11 : i64} {
  func.func @s2encoder_kernel(%arg0: i32, %arg1: memref<16x16xbf16, #tpu.memory_space<vmem>>, %arg2: memref<16x128xf32, #tpu.memory_space<vmem>>, %arg3: memref<16x32xbf16, #tpu.memory_space<vmem>>, %arg4: memref<1x32xf32, #tpu.memory_space<vmem>>, %arg5: memref<2x32x32xbf16, #tpu.memory_space<vmem>>, %arg6: memref<2x1x32xf32, #tpu.memory_space<vmem>>, %arg7: memref<16x256xbf16, #tpu.memory_space<vmem>>, %arg8: memref<32x256xbf16, #tpu.memory_space<vmem>>, %arg9: memref<1x256xf32, #tpu.memory_space<vmem>>, %arg10: memref<16x512xf32, #tpu.memory_space<vmem>>) attributes {dimension_semantics = [#tpu.dimension_semantics<parallel>], iteration_bounds = array<i64: 1>, scalar_prefetch = 0 : i64, scratch_operands = 0 : i64, tpu.core_type = #tpu.core_type<tc>, window_params = [{transform_indices = @transform_0, window_bounds = array<i64: 16, 16>}, {transform_indices = @transform_1, window_bounds = array<i64: 16, 128>}, {pipeline_mode = #tpu.pipeline_mode<synchronous>, transform_indices = @transform_2, window_bounds = array<i64: 16, 32>}, {pipeline_mode = #tpu.pipeline_mode<synchronous>, transform_indices = @transform_3, window_bounds = array<i64: 1, 32>}, {pipeline_mode = #tpu.pipeline_mode<synchronous>, transform_indices = @transform_4, window_bounds = array<i64: 2, 32, 32>}, {pipeline_mode = #tpu.pipeline_mode<synchronous>, transform_indices = @transform_5, window_bounds = array<i64: 2, 1, 32>}, {pipeline_mode = #tpu.pipeline_mode<synchronous>, transform_indices = @transform_6, window_bounds = array<i64: 16, 256>}, {pipeline_mode = #tpu.pipeline_mode<synchronous>, transform_indices = @transform_7, window_bounds = array<i64: 32, 256>}, {pipeline_mode = #tpu.pipeline_mode<synchronous>, transform_indices = @transform_8, window_bounds = array<i64: 1, 256>}, {transform_indices = @transform_9, window_bounds = array<i64: 16, 512>}]} {
    %c0 = arith.constant 0 : index
    %c0_0 = arith.constant 0 : index
    %0 = vector.load %arg1[%c0, %c0_0] : memref<16x16xbf16, #tpu.memory_space<vmem>>, vector<16x16xbf16>
    %c0_1 = arith.constant 0 : index
    %c0_2 = arith.constant 0 : index
    %1 = vector.load %arg3[%c0_1, %c0_2] : memref<16x32xbf16, #tpu.memory_space<vmem>>, vector<16x32xbf16>
    %cst = arith.constant dense<0.000000e+00> : vector<16x32xf32>
    %2 = tpu.matmul %0, %1, %cst {dimension_numbers = #tpu.dot_dimension_numbers<[1], [0], [0], [1], [0, 0, 1, 1], [], []>} : vector<16x16xbf16>, vector<16x32xbf16>, vector<16x32xf32> -> vector<16x32xf32>
    %c0_3 = arith.constant 0 : index
    %c0_4 = arith.constant 0 : index
    %3 = vector.load %arg4[%c0_3, %c0_4] : memref<1x32xf32, #tpu.memory_space<vmem>>, vector<1x32xf32>
    %4 = vector.broadcast %3 : vector<1x32xf32> to vector<16x32xf32>
    %5 = arith.addf %2, %4 : vector<16x32xf32>
    %6 = arith.truncf %5 : vector<16x32xf32> to vector<16x32xbf16>
    %c0_5 = arith.constant 0 : index
    %c0_6 = arith.constant 0 : index
    %c0_7 = arith.constant 0 : index
    %7 = vector.load %arg5[%c0_5, %c0_6, %c0_7] : memref<2x32x32xbf16, #tpu.memory_space<vmem>>, vector<1x32x32xbf16>
    %8 = vector.shape_cast %7 : vector<1x32x32xbf16> to vector<32x32xbf16>
    %cst_8 = arith.constant dense<0.000000e+00> : vector<16x32xf32>
    %9 = tpu.matmul %6, %8, %cst_8 {dimension_numbers = #tpu.dot_dimension_numbers<[1], [0], [0], [1], [0, 0, 1, 1], [], []>} : vector<16x32xbf16>, vector<32x32xbf16>, vector<16x32xf32> -> vector<16x32xf32>
    %c0_9 = arith.constant 0 : index
    %c0_10 = arith.constant 0 : index
    %c0_11 = arith.constant 0 : index
    %10 = vector.load %arg6[%c0_9, %c0_10, %c0_11] : memref<2x1x32xf32, #tpu.memory_space<vmem>>, vector<1x1x32xf32>
    %11 = vector.shape_cast %10 : vector<1x1x32xf32> to vector<1x32xf32>
    %12 = vector.broadcast %11 : vector<1x32xf32> to vector<16x32xf32>
    %13 = arith.addf %9, %12 : vector<16x32xf32>
    %cst_12 = arith.constant 0.000000e+00 : f32
    %14 = vector.broadcast %cst_12 : f32 to vector<16x32xf32>
    %15 = arith.maximumf %13, %14 : vector<16x32xf32>
    %16 = arith.truncf %15 : vector<16x32xf32> to vector<16x32xbf16>
    %c1 = arith.constant 1 : index
    %c0_13 = arith.constant 0 : index
    %c0_14 = arith.constant 0 : index
    %17 = vector.load %arg5[%c1, %c0_13, %c0_14] : memref<2x32x32xbf16, #tpu.memory_space<vmem>>, vector<1x32x32xbf16>
    %18 = vector.shape_cast %17 : vector<1x32x32xbf16> to vector<32x32xbf16>
    %cst_15 = arith.constant dense<0.000000e+00> : vector<16x32xf32>
    %19 = tpu.matmul %16, %18, %cst_15 {dimension_numbers = #tpu.dot_dimension_numbers<[1], [0], [0], [1], [0, 0, 1, 1], [], []>} : vector<16x32xbf16>, vector<32x32xbf16>, vector<16x32xf32> -> vector<16x32xf32>
    %c1_16 = arith.constant 1 : index
    %c0_17 = arith.constant 0 : index
    %c0_18 = arith.constant 0 : index
    %20 = vector.load %arg6[%c1_16, %c0_17, %c0_18] : memref<2x1x32xf32, #tpu.memory_space<vmem>>, vector<1x1x32xf32>
    %21 = vector.shape_cast %20 : vector<1x1x32xf32> to vector<1x32xf32>
    %22 = vector.broadcast %21 : vector<1x32xf32> to vector<16x32xf32>
    %23 = arith.addf %19, %22 : vector<16x32xf32>
    %cst_19 = arith.constant 0.000000e+00 : f32
    %24 = vector.broadcast %cst_19 : f32 to vector<16x32xf32>
    %25 = arith.maximumf %23, %24 : vector<16x32xf32>
    %c0_20 = arith.constant 0 : index
    %c0_21 = arith.constant 0 : index
    %26 = vector.load %arg7[%c0_20, %c0_21] : memref<16x256xbf16, #tpu.memory_space<vmem>>, vector<16x256xbf16>
    %cst_22 = arith.constant dense<0.000000e+00> : vector<16x256xf32>
    %27 = tpu.matmul %0, %26, %cst_22 {dimension_numbers = #tpu.dot_dimension_numbers<[1], [0], [0], [1], [0, 0, 1, 1], [], []>} : vector<16x16xbf16>, vector<16x256xbf16>, vector<16x256xf32> -> vector<16x256xf32>
    %28 = arith.truncf %25 : vector<16x32xf32> to vector<16x32xbf16>
    %c0_23 = arith.constant 0 : index
    %c0_24 = arith.constant 0 : index
    %29 = vector.load %arg8[%c0_23, %c0_24] : memref<32x256xbf16, #tpu.memory_space<vmem>>, vector<32x256xbf16>
    %cst_25 = arith.constant dense<0.000000e+00> : vector<16x256xf32>
    %30 = tpu.matmul %28, %29, %cst_25 {dimension_numbers = #tpu.dot_dimension_numbers<[1], [0], [0], [1], [0, 0, 1, 1], [], []>} : vector<16x32xbf16>, vector<32x256xbf16>, vector<16x256xf32> -> vector<16x256xf32>
    %31 = arith.addf %27, %30 : vector<16x256xf32>
    %c0_26 = arith.constant 0 : index
    %c0_27 = arith.constant 0 : index
    %32 = vector.load %arg9[%c0_26, %c0_27] : memref<1x256xf32, #tpu.memory_space<vmem>>, vector<1x256xf32>
    %33 = vector.broadcast %32 : vector<1x256xf32> to vector<16x256xf32>
    %34 = arith.addf %31, %33 : vector<16x256xf32>
    %35 = vector.extract_strided_slice %34 {offsets = [0, 0], sizes = [16, 128], strides = [1, 1]} : vector<16x256xf32> to vector<16x128xf32>
    %36 = vector.extract_strided_slice %34 {offsets = [0, 128], sizes = [16, 128], strides = [1, 1]} : vector<16x256xf32> to vector<16x128xf32>
    %cst_28 = arith.constant 5.000000e-01 : f32
    %37 = vector.broadcast %cst_28 : f32 to vector<16x128xf32>
    %38 = arith.mulf %37, %36 : vector<16x128xf32>
    %39 = math.exp %38 : vector<16x128xf32>
    %c0_29 = arith.constant 0 : index
    %c0_30 = arith.constant 0 : index
    %40 = vector.load %arg2[%c0_29, %c0_30] : memref<16x128xf32, #tpu.memory_space<vmem>>, vector<16x128xf32>
    %41 = arith.mulf %40, %39 : vector<16x128xf32>
    %42 = arith.addf %41, %35 : vector<16x128xf32>
    %c0_31 = arith.constant 0 : index
    %c0_32 = arith.constant 0 : index
    %43 = vector.load %arg10[%c0_31, %c0_32] : memref<16x512xf32, #tpu.memory_space<vmem>>, vector<16x128xf32>
    tpu.vector_store %arg10[%c0_31, %c0_32], %35 {strides = array<i32>} : memref<16x512xf32, #tpu.memory_space<vmem>>, vector<16x128xf32>,
    %c0_33 = arith.constant 0 : index
    %c128 = arith.constant 128 : index
    %44 = vector.load %arg10[%c0_33, %c128] : memref<16x512xf32, #tpu.memory_space<vmem>>, vector<16x128xf32>
    tpu.vector_store %arg10[%c0_33, %c128], %39 {strides = array<i32>} : memref<16x512xf32, #tpu.memory_space<vmem>>, vector<16x128xf32>,
    %c0_34 = arith.constant 0 : index
    %c256 = arith.constant 256 : index
    %45 = vector.load %arg10[%c0_34, %c256] : memref<16x512xf32, #tpu.memory_space<vmem>>, vector<16x128xf32>
    tpu.vector_store %arg10[%c0_34, %c256], %36 {strides = array<i32>} : memref<16x512xf32, #tpu.memory_space<vmem>>, vector<16x128xf32>,
    %c0_35 = arith.constant 0 : index
    %c384 = arith.constant 384 : index
    %46 = vector.load %arg10[%c0_35, %c384] : memref<16x512xf32, #tpu.memory_space<vmem>>, vector<16x128xf32>
    tpu.vector_store %arg10[%c0_35, %c384], %42 {strides = array<i32>} : memref<16x512xf32, #tpu.memory_space<vmem>>, vector<16x128xf32>,
    return
  }
  func.func @transform_0(%arg0: i32) -> (i32, i32) {
    %c0_i32 = arith.constant 0 : i32
    %c0_i32_0 = arith.constant 0 : i32
    return %arg0, %c0_i32 : i32, i32
  }
  func.func @transform_1(%arg0: i32) -> (i32, i32) {
    %c0_i32 = arith.constant 0 : i32
    %c0_i32_0 = arith.constant 0 : i32
    return %arg0, %c0_i32 : i32, i32
  }
  func.func @transform_2(%arg0: i32) -> (i32, i32) {
    %c0_i32 = arith.constant 0 : i32
    %c0_i32_0 = arith.constant 0 : i32
    %c0_i32_1 = arith.constant 0 : i32
    return %c0_i32, %c0_i32_0 : i32, i32
  }
  func.func @transform_3(%arg0: i32) -> (i32, i32) {
    %c0_i32 = arith.constant 0 : i32
    %c0_i32_0 = arith.constant 0 : i32
    %c0_i32_1 = arith.constant 0 : i32
    return %c0_i32, %c0_i32_0 : i32, i32
  }
  func.func @transform_4(%arg0: i32) -> (i32, i32, i32) {
    %c0_i32 = arith.constant 0 : i32
    %c0_i32_0 = arith.constant 0 : i32
    %c0_i32_1 = arith.constant 0 : i32
    %c0_i32_2 = arith.constant 0 : i32
    return %c0_i32, %c0_i32_0, %c0_i32_1 : i32, i32, i32
  }
  func.func @transform_5(%arg0: i32) -> (i32, i32, i32) {
    %c0_i32 = arith.constant 0 : i32
    %c0_i32_0 = arith.constant 0 : i32
    %c0_i32_1 = arith.constant 0 : i32
    %c0_i32_2 = arith.constant 0 : i32
    return %c0_i32, %c0_i32_0, %c0_i32_1 : i32, i32, i32
  }
  func.func @transform_6(%arg0: i32) -> (i32, i32) {
    %c0_i32 = arith.constant 0 : i32
    %c0_i32_0 = arith.constant 0 : i32
    %c0_i32_1 = arith.constant 0 : i32
    return %c0_i32, %c0_i32_0 : i32, i32
  }
  func.func @transform_7(%arg0: i32) -> (i32, i32) {
    %c0_i32 = arith.constant 0 : i32
    %c0_i32_0 = arith.constant 0 : i32
    %c0_i32_1 = arith.constant 0 : i32
    return %c0_i32, %c0_i32_0 : i32, i32
  }
  func.func @transform_8(%arg0: i32) -> (i32, i32) {
    %c0_i32 = arith.constant 0 : i32
    %c0_i32_0 = arith.constant 0 : i32
    %c0_i32_1 = arith.constant 0 : i32
    return %c0_i32, %c0_i32_0 : i32, i32
  }
  func.func @transform_9(%arg0: i32) -> (i32, i32) {
    %c0_i32 = arith.constant 0 : i32
    %c0_i32_0 = arith.constant 0 : i32
    return %arg0, %c0_i32 : i32, i32
  }
}

</mosaic_0001>

<llo_original>
// kernel: tpu_custom_call.1
$region0: #{tpu_custom_call.1}
  #allocation0 [shape = 'u32[]', space=smem, size = 0x4, offset = 0x4, fixed_abs, tag = 'smem constant byte address 0x4 - core index']
  #allocation1 [shape = 'u32[144,128]{1,0:T(1,128)}', space=vmem, size = 0x12000, scoped, tag = 'internal scratch']
  %s0 = inlined_call_operand.hbm [shape: bf16[16,16], index: 0, kind: input, shape index: {}]
  %s1 = inlined_call_operand.hbm [shape: f32[16,128], index: 1, kind: input, shape index: {}]
  %s2 = inlined_call_operand.hbm [shape: bf16[16,32], index: 2, kind: input, shape index: {}]
  %s3 = inlined_call_operand.hbm [shape: f32[1,32], index: 3, kind: input, shape index: {}]
  %s4 = inlined_call_operand.hbm [shape: bf16[2,32,32], index: 4, kind: input, shape index: {}]
  %s5 = inlined_call_operand.hbm [shape: f32[2,1,32], index: 5, kind: input, shape index: {}]
  %s6 = inlined_call_operand.hbm [shape: bf16[16,256], index: 6, kind: input, shape index: {}]
  %s7 = inlined_call_operand.hbm [shape: bf16[32,256], index: 7, kind: input, shape index: {}]
  %s8 = inlined_call_operand.hbm [shape: f32[1,256], index: 8, kind: input, shape index: {}]
  %s9 = inlined_call_operand.hbm [shape: f32[16,512], index: 9, kind: output, shape index: {}]
  %s10 = sld [smem:[#allocation0]]
  $region82: #{tpu_custom_call.1} parent=0
    _
  %s12 = ssub.s32 1, %s10
  %s13 = scalar_select 0, %s12, %s10
  $region1: #{tpu_custom_call.1} parent=0
    #allocation2 [shape = 'u8[4096]{0}', space=vmem, size = 0x1000, scoped, tag = 'input window, operand 0, single buffered']
    #allocation3 [shape = 's32[1]{0}', space=sflag, size = 0x4, scoped, tag = 'scoped memory for tpu_custom_call.1']
    #allocation4 [shape = 's32[1]{0}', space=sflag, size = 0x4, scoped, tag = 'scoped memory for tpu_custom_call.1']
    #allocation5 [shape = 'u8[8192]{0}', space=vmem, size = 0x2000, scoped, tag = 'input window, operand 1, single buffered']
    #allocation6 [shape = 's32[1]{0}', space=sflag, size = 0x4, scoped, tag = 'scoped memory for tpu_custom_call.1']
    #allocation7 [shape = 'u8[4096]{0}', space=vmem, size = 0x1000, scoped, tag = 'input window, operand 2, single buffered']
    #allocation8 [shape = 'u8[512]{0}', space=vmem, size = 0x400, scoped, tag = 'input window, operand 3, single buffered']
    #allocation9 [shape = 's32[1]{0}', space=sflag, size = 0x4, scoped, tag = 'scoped memory for tpu_custom_call.1']
    #allocation10 [shape = 'u8[16384]{0}', space=vmem, size = 0x4000, scoped, tag = 'input window, operand 4, single buffered']
    #allocation11 [shape = 'u8[1024]{0}', space=vmem, size = 0x400, scoped, tag = 'input window, operand 5, single buffered']
    #allocation12 [shape = 's32[1]{0}', space=sflag, size = 0x4, scoped, tag = 'scoped memory for tpu_custom_call.1']
    #allocation13 [shape = 'u8[8192]{0}', space=vmem, size = 0x2000, scoped, tag = 'input window, operand 6, single buffered']
    #allocation14 [shape = 'u8[16384]{0}', space=vmem, size = 0x4000, scoped, tag = 'input window, operand 7, single buffered']
    #allocation15 [shape = 's32[1]{0}', space=sflag, size = 0x4, scoped, tag = 'scoped memory for tpu_custom_call.1']
    #allocation16 [shape = 'u8[1024]{0}', space=vmem, size = 0x400, scoped, tag = 'input window, operand 8, single buffered']
    #allocation17 [shape = 'u8[32768]{0}', space=vmem, size = 0x8000, scoped, tag = 'output window, operand 0, single buffered']
    %14 = vsyncpa [#allocation3], 0
    %15 = vsyncpa [#allocation6], 0
    %16 = vsyncpa [#allocation9], 0
    %17 = vsyncpa [#allocation12], 0
    %18 = vsyncpa [#allocation15], 0
    %19 = vsyncpa [#allocation4], 0
    // Predicated region
    $region2: #{tpu_custom_call.1} parent=1 // pred_check
      _
    $region3: #{tpu_custom_call.1} parent=1 // pred_check_branch
      %21 = sbr.rel (0) target = $region5
    $region4: #{tpu_custom_call.1} parent=1 // pred_region
      %s23 = ssub.s32 128, 128
      %24 = vsyncadd [#allocation3], %s23
      %s25 = sshll.u32 [#allocation2], 4
      %s26 = int_to_ptr.vmem [resolvable:$true] %s25
      %31 = dma.hbm_to_vmem [thread:$0]  %s0, 128, %s26, [#allocation3], 64, 64, 4
    $region5: #{tpu_custom_call.1} parent=1 // pred_fallthru
      _
    // Predicated region
    $region6: #{tpu_custom_call.1} parent=1 // pred_check
      _
    $region7: #{tpu_custom_call.1} parent=1 // pred_check_branch
      %33 = sbr.rel (0) target = $region9
    $region8: #{tpu_custom_call.1} parent=1 // pred_region
      %s35 = ssub.s32 256, 256
      %36 = vsyncadd [#allocation6], %s35
      %s37 = sshll.u32 [#allocation5], 4
      %s38 = int_to_ptr.vmem [resolvable:$true] %s37
      %43 = dma.hbm_to_vmem [thread:$0]  %s1, 256, %s38, [#allocation6], 128, 128, 8
    $region9: #{tpu_custom_call.1} parent=1 // pred_fallthru
      _
    // Predicated region
    $region10: #{tpu_custom_call.1} parent=1 // pred_check
      _
    $region11: #{tpu_custom_call.1} parent=1 // pred_check_branch
      %45 = sbr.rel (0) target = $region13
    $region12: #{tpu_custom_call.1} parent=1 // pred_region
      %s47 = ssub.s32 128, 128
      %48 = vsyncadd [#allocation6], %s47
      %s49 = sshll.u32 [#allocation7], 4
      %s50 = int_to_ptr.vmem [resolvable:$true] %s49
      %55 = dma.hbm_to_vmem [thread:$0]  %s2, 128, %s50, [#allocation6], 64, 64, 4
    $region13: #{tpu_custom_call.1} parent=1 // pred_fallthru
      _
    // Predicated region
    $region14: #{tpu_custom_call.1} parent=1 // pred_check
      _
    $region15: #{tpu_custom_call.1} parent=1 // pred_check_branch
      %57 = sbr.rel (0) target = $region17
    $region16: #{tpu_custom_call.1} parent=1 // pred_region
      %s59 = ssub.s32 16, 16
      %60 = vsyncadd [#allocation9], %s59
      %s62 = sshll.u32 [#allocation8], 4
      %s63 = int_to_ptr.vmem [resolvable:$true] %s62
      %65 = dma.hbm_to_vmem [thread:$0]  %s3, 16, %s63, [#allocation9]
    $region17: #{tpu_custom_call.1} parent=1 // pred_fallthru
      _
    // Predicated region
    $region18: #{tpu_custom_call.1} parent=1 // pred_check
      _
    $region19: #{tpu_custom_call.1} parent=1 // pred_check_branch
      %67 = sbr.rel (0) target = $region21
    $region20: #{tpu_custom_call.1} parent=1 // pred_region
      %s69 = ssub.s32 512, 512
      %70 = vsyncadd [#allocation9], %s69
      %s71 = sshll.u32 [#allocation10], 4
      %s72 = int_to_ptr.vmem [resolvable:$true] %s71
      %77 = dma.hbm_to_vmem [thread:$0]  %s4, 512, %s72, [#allocation9], 64, 64, 4
    $region21: #{tpu_custom_call.1} parent=1 // pred_fallthru
      _
    // Predicated region
    $region22: #{tpu_custom_call.1} parent=1 // pred_check
      _
    $region23: #{tpu_custom_call.1} parent=1 // pred_check_branch
      %79 = sbr.rel (0) target = $region25
    $region24: #{tpu_custom_call.1} parent=1 // pred_region
      %s81 = ssub.s32 32, 32
      %82 = vsyncadd [#allocation12], %s81
      %s83 = sshll.u32 [#allocation11], 4
      %s84 = int_to_ptr.vmem [resolvable:$true] %s83
      %89 = dma.hbm_to_vmem [thread:$0]  %s5, 32, %s84, [#allocation12], 16, 16, 1
    $region25: #{tpu_custom_call.1} parent=1 // pred_fallthru
      _
    // Predicated region
    $region26: #{tpu_custom_call.1} parent=1 // pred_check
      _
    $region27: #{tpu_custom_call.1} parent=1 // pred_check_branch
      %91 = sbr.rel (0) target = $region29
    $region28: #{tpu_custom_call.1} parent=1 // pred_region
      %s93 = ssub.s32 256, 256
      %94 = vsyncadd [#allocation12], %s93
      %s95 = sshll.u32 [#allocation13], 4
      %s96 = int_to_ptr.vmem [resolvable:$true] %s95
      %101 = dma.hbm_to_vmem [thread:$0]  %s6, 256, %s96, [#allocation12], 128, 128, 8
    $region29: #{tpu_custom_call.1} parent=1 // pred_fallthru
      _
    // Predicated region
    $region30: #{tpu_custom_call.1} parent=1 // pred_check
      _
    $region31: #{tpu_custom_call.1} parent=1 // pred_check_branch
      %103 = sbr.rel (0) target = $region33
    $region32: #{tpu_custom_call.1} parent=1 // pred_region
      %s105 = ssub.s32 512, 512
      %106 = vsyncadd [#allocation15], %s105
      %s107 = sshll.u32 [#allocation14], 4
      %s108 = int_to_ptr.vmem [resolvable:$true] %s107
      %113 = dma.hbm_to_vmem [thread:$0]  %s7, 512, %s108, [#allocation15], 128, 128, 8
    $region33: #{tpu_custom_call.1} parent=1 // pred_fallthru
      _
    // Predicated region
    $region34: #{tpu_custom_call.1} parent=1 // pred_check
      _
    $region35: #{tpu_custom_call.1} parent=1 // pred_check_branch
      %115 = sbr.rel (0) target = $region37
    $region36: #{tpu_custom_call.1} parent=1 // pred_region
      %s117 = ssub.s32 32, 32
      %118 = vsyncadd [#allocation15], %s117
      %s120 = sshll.u32 [#allocation16], 4
      %s121 = int_to_ptr.vmem [resolvable:$true] %s120
      %123 = dma.hbm_to_vmem [thread:$0]  %s8, 32, %s121, [#allocation15]
    $region37: #{tpu_custom_call.1} parent=1 // pred_fallthru
      _
    // Predicated region
    $region38: #{tpu_custom_call.1} parent=1 // pred_check
      _
    $region39: #{tpu_custom_call.1} parent=1 // pred_check_branch
      %125 = sbr.rel (0) target = $region41
    $region40: #{tpu_custom_call.1} parent=1 // pred_region
      %126 = dma.done [#allocation3], 128
    $region41: #{tpu_custom_call.1} parent=1 // pred_fallthru
      _
    // Predicated region
    $region42: #{tpu_custom_call.1} parent=1 // pred_check
      _
    $region43: #{tpu_custom_call.1} parent=1 // pred_check_branch
      %128 = sbr.rel (0) target = $region45
    $region44: #{tpu_custom_call.1} parent=1 // pred_region
      %129 = dma.done [#allocation6], 256
    $region45: #{tpu_custom_call.1} parent=1 // pred_fallthru
      _
    // Predicated region
    $region46: #{tpu_custom_call.1} parent=1 // pred_check
      _
    $region47: #{tpu_custom_call.1} parent=1 // pred_check_branch
      %131 = sbr.rel (0) target = $region49
    $region48: #{tpu_custom_call.1} parent=1 // pred_region
      %132 = dma.done [#allocation6], 128
    $region49: #{tpu_custom_call.1} parent=1 // pred_fallthru
      _
    // Predicated region
    $region50: #{tpu_custom_call.1} parent=1 // pred_check
      _
    $region51: #{tpu_custom_call.1} parent=1 // pred_check_branch
      %134 = sbr.rel (0) target = $region53
    $region52: #{tpu_custom_call.1} parent=1 // pred_region
      %135 = dma.done [#allocation9], 16
    $region53: #{tpu_custom_call.1} parent=1 // pred_fallthru
      _
    // Predicated region
    $region54: #{tpu_custom_call.1} parent=1 // pred_check
      _
    $region55: #{tpu_custom_call.1} parent=1 // pred_check_branch
      %137 = sbr.rel (0) target = $region57
    $region56: #{tpu_custom_call.1} parent=1 // pred_region
      %138 = dma.done [#allocation9], 512
    $region57: #{tpu_custom_call.1} parent=1 // pred_fallthru
      _
    // Predicated region
    $region58: #{tpu_custom_call.1} parent=1 // pred_check
      _
    $region59: #{tpu_custom_call.1} parent=1 // pred_check_branch
      %140 = sbr.rel (0) target = $region61
    $region60: #{tpu_custom_call.1} parent=1 // pred_region
      %141 = dma.done [#allocation12], 32
    $region61: #{tpu_custom_call.1} parent=1 // pred_fallthru
      _
    // Predicated region
    $region62: #{tpu_custom_call.1} parent=1 // pred_check
      _
    $region63: #{tpu_custom_call.1} parent=1 // pred_check_branch
      %143 = sbr.rel (0) target = $region65
    $region64: #{tpu_custom_call.1} parent=1 // pred_region
      %144 = dma.done [#allocation12], 256
    $region65: #{tpu_custom_call.1} parent=1 // pred_fallthru
      _
    // Predicated region
    $region66: #{tpu_custom_call.1} parent=1 // pred_check
      _
    $region67: #{tpu_custom_call.1} parent=1 // pred_check_branch
      %146 = sbr.rel (0) target = $region69
    $region68: #{tpu_custom_call.1} parent=1 // pred_region
      %147 = dma.done [#allocation15], 512
    $region69: #{tpu_custom_call.1} parent=1 // pred_fallthru
      _
    // Predicated region
    $region70: #{tpu_custom_call.1} parent=1 // pred_check
      _
    $region71: #{tpu_custom_call.1} parent=1 // pred_check_branch
      %149 = sbr.rel (0) target = $region73
    $region72: #{tpu_custom_call.1} parent=1 // pred_region
      %150 = dma.done [#allocation15], 32
    $region73: #{tpu_custom_call.1} parent=1 // pred_fallthru
      _
    %v152 = vld [vmem:[#allocation2] sm:$0xf]
    %v153 = vld [vmem:[#allocation2 + $0x4] sm:$0xf]
    %v154 = vld [vmem:[#allocation7] sm:$0xf]
    %v155 = vld [vmem:[#allocation7 + $0x4] sm:$0xf]
    %v156 = vld [vmem:[#allocation8] sm:$0x1]
    %v158 = vlaneseq
    %v159 = vshrl.u32 %v158, 7
    %v160 = vsub.s32 0, %v159
    %v161 = vrot.slane %v156, %v160
    %v165 = vunpack.c.l.b16 %v152
    %v166 = vunpack.c.l.b16 %v153
    %v167 = vpack.c.b16 %v166, %v165
    %v170 = vunpack.c.l.b16 %v154
    %v171 = vunpack.c.l.b16 %v155
    %v172 = vpack.c.b16 %v171, %v170
    %vm174 = vcmask 130048
    %v176 = vsel %vm174, %v167, 0
    %178 = vmatprep.subr.bf16.mxu0 0
    %179 = vmatpush1.bf16.msra.mxu0 %v172
    %180 = vmatprep.subr.bf16.mxu0 0
    %181 = vmatpush1.bf16.msra.mxu0 0
    %182 = vmatprep.subr.bf16.mxu0 0
    %183 = vmatpush1.bf16.msra.mxu0 0
    %184 = vmatprep.subr.bf16.mxu0 0
    %185 = vmatpush1.bf16.msra.mxu0 0
    %186 = vmatprep.subr.bf16.mxu0 0
    %187 = vmatpush1.bf16.msra.mxu0 0
    %188 = vmatprep.subr.bf16.mxu0 0
    %189 = vmatpush1.bf16.msra.mxu0 0
    %190 = vmatprep.subr.bf16.mxu0 0
    %191 = vmatpush1.bf16.msra.mxu0 0
    %192 = vmatprep.subr.bf16.mxu0 0
    %193 = vmatpush1.bf16.msra.mxu0 0
    %194 = vmatprep.subr.bf16.mxu0 0
    %195 = vmatpush1.bf16.msra.mxu0 0
    %196 = vmatprep.subr.bf16.mxu0 0
    %197 = vmatpush1.bf16.msra.mxu0 0
    %198 = vmatprep.subr.bf16.mxu0 0
    %199 = vmatpush1.bf16.msra.mxu0 0
    %200 = vmatprep.subr.bf16.mxu0 0
    %201 = vmatpush1.bf16.msra.mxu0 0
    %202 = vmatprep.subr.bf16.mxu0 0
    %203 = vmatpush1.bf16.msra.mxu0 0
    %204 = vmatprep.subr.bf16.mxu0 0
    %205 = vmatpush1.bf16.msra.mxu0 0
    %206 = vmatprep.subr.bf16.mxu0 0
    %207 = vmatpush1.bf16.msra.mxu0 0
    %208 = vmatprep.subr.bf16.mxu0 0
    %209 = vmatpush1.bf16.msra.mxu0 0
    %210 = vmatprep.mubr.bf16.mxu0 0
    %211 = vmatmul.mubr.bf16.gmra.mrb[0].mxu0 %v176
    %v212 = vpop.f32.mrb[0].mxu0
    %v213 = vadd.f32 %v161, %v212
    %v214 = vpop.f32.mrb[0].mxu0
    %v215 = vpop.f32.mrb[0].mxu0
    %v216 = vadd.f32 %v161, %v215
    %v217 = vpop.f32.mrb[0].mxu0
    %218 = vdwg.mxu0
    %v219 = vpack.c.bf16 %v216, %v213
    %v220 = vld [vmem:[#allocation10] sm:$0xf]
    %v221 = vld [vmem:[#allocation10 + $0x4] sm:$0xf]
    %v222 = vld [vmem:[#allocation10 + $0x8] sm:$0xf]
    %v223 = vld [vmem:[#allocation10 + $0xc] sm:$0xf]
    %v224 = vld [vmem:[#allocation11] sm:$0x1]
    %v226 = vlaneseq
    %v227 = vshrl.u32 %v226, 7
    %v228 = vsub.s32 0, %v227
    %v229 = vrot.slane %v224, %v228
    %v235 = vunpack.c.l.b16 %v220
    %v236 = vunpack.c.l.b16 %v221
    %v237 = vunpack.c.l.b16 %v222
    %v238 = vunpack.c.l.b16 %v223
    %v239 = vpack.c.b16 %v236, %v235
    %v240 = vpack.c.b16 %v238, %v237
    %vm243 = vcmask 261120
    %v245 = vsel %vm243, %v219, 0
    %247 = vmatprep.subr.bf16.mxu0 0
    %248 = vmatpush1.bf16.msra.mxu0 %v239
    %249 = vmatprep.subr.bf16.mxu0 0
    %250 = vmatpush1.bf16.msra.mxu0 %v240
    %251 = vmatprep.subr.bf16.mxu0 0
    %252 = vmatpush1.bf16.msra.mxu0 0
    %253 = vmatprep.subr.bf16.mxu0 0
    %254 = vmatpush1.bf16.msra.mxu0 0
    %255 = vmatprep.subr.bf16.mxu0 0
    %256 = vmatpush1.bf16.msra.mxu0 0
    %257 = vmatprep.subr.bf16.mxu0 0
    %258 = vmatpush1.bf16.msra.mxu0 0
    %259 = vmatprep.subr.bf16.mxu0 0
    %260 = vmatpush1.bf16.msra.mxu0 0
    %261 = vmatprep.subr.bf16.mxu0 0
    %262 = vmatpush1.bf16.msra.mxu0 0
    %263 = vmatprep.subr.bf16.mxu0 0
    %264 = vmatpush1.bf16.msra.mxu0 0
    %265 = vmatprep.subr.bf16.mxu0 0
    %266 = vmatpush1.bf16.msra.mxu0 0
    %267 = vmatprep.subr.bf16.mxu0 0
    %268 = vmatpush1.bf16.msra.mxu0 0
    %269 = vmatprep.subr.bf16.mxu0 0
    %270 = vmatpush1.bf16.msra.mxu0 0
    %271 = vmatprep.subr.bf16.mxu0 0
    %272 = vmatpush1.bf16.msra.mxu0 0
    %273 = vmatprep.subr.bf16.mxu0 0
    %274 = vmatpush1.bf16.msra.mxu0 0
    %275 = vmatprep.subr.bf16.mxu0 0
    %276 = vmatpush1.bf16.msra.mxu0 0
    %277 = vmatprep.subr.bf16.mxu0 0
    %278 = vmatpush1.bf16.msra.mxu0 0
    %279 = vmatprep.mubr.bf16.mxu0 0
    %280 = vmatmul.mubr.bf16.gmra.mrb[0].mxu0 %v245
    %v281 = vpop.f32.mrb[0].mxu0
    %v282 = vadd.f32 %v229, %v281
    %v283 = vpop.f32.mrb[0].mxu0
    %v284 = vpop.f32.mrb[0].mxu0
    %v285 = vadd.f32 %v229, %v284
    %v286 = vpop.f32.mrb[0].mxu0
    %287 = vdwg.mxu0
    %v288 = vmax.f32 %v282, 0.0
    %v289 = vmax.f32 %v285, 0.0
    %v290 = vpack.c.bf16 %v289, %v288
    %s291 = scalar_lea.vmem [#allocation10], 16
    %v292 = vld [vmem:[%s291] sm:$0xf]
    %v293 = vld [vmem:[%s291 + $0x4] sm:$0xf]
    %v294 = vld [vmem:[%s291 + $0x8] sm:$0xf]
    %v295 = vld [vmem:[%s291 + $0xc] sm:$0xf]
    %s296 = scalar_lea.vmem [#allocation11], 1
    %v297 = vld [vmem:[%s296] sm:$0x1]
    %v299 = vlaneseq
    %v300 = vshrl.u32 %v299, 7
    %v301 = vsub.s32 0, %v300
    %v302 = vrot.slane %v297, %v301
    %v308 = vunpack.c.l.b16 %v292
    %v309 = vunpack.c.l.b16 %v293
    %v310 = vunpack.c.l.b16 %v294
    %v311 = vunpack.c.l.b16 %v295
    %v312 = vpack.c.b16 %v309, %v308
    %v313 = vpack.c.b16 %v311, %v310
    %v317 = vsel %vm243, %v290, 0
    %319 = vmatprep.subr.bf16.mxu0 0
    %320 = vmatpush1.bf16.msra.mxu0 %v312
    %321 = vmatprep.subr.bf16.mxu0 0
    %322 = vmatpush1.bf16.msra.mxu0 %v313
    %323 = vmatprep.subr.bf16.mxu0 0
    %324 = vmatpush1.bf16.msra.mxu0 0
    %325 = vmatprep.subr.bf16.mxu0 0
    %326 = vmatpush1.bf16.msra.mxu0 0
    %327 = vmatprep.subr.bf16.mxu0 0
    %328 = vmatpush1.bf16.msra.mxu0 0
    %329 = vmatprep.subr.bf16.mxu0 0
    %330 = vmatpush1.bf16.msra.mxu0 0
    %331 = vmatprep.subr.bf16.mxu0 0
    %332 = vmatpush1.bf16.msra.mxu0 0
    %333 = vmatprep.subr.bf16.mxu0 0
    %334 = vmatpush1.bf16.msra.mxu0 0
    %335 = vmatprep.subr.bf16.mxu0 0
    %336 = vmatpush1.bf16.msra.mxu0 0
    %337 = vmatprep.subr.bf16.mxu0 0
    %338 = vmatpush1.bf16.msra.mxu0 0
    %339 = vmatprep.subr.bf16.mxu0 0
    %340 = vmatpush1.bf16.msra.mxu0 0
    %341 = vmatprep.subr.bf16.mxu0 0
    %342 = vmatpush1.bf16.msra.mxu0 0
    %343 = vmatprep.subr.bf16.mxu0 0
    %344 = vmatpush1.bf16.msra.mxu0 0
    %345 = vmatprep.subr.bf16.mxu0 0
    %346 = vmatpush1.bf16.msra.mxu0 0
    %347 = vmatprep.subr.bf16.mxu0 0
    %348 = vmatpush1.bf16.msra.mxu0 0
    %349 = vmatprep.subr.bf16.mxu0 0
    %350 = vmatpush1.bf16.msra.mxu0 0
    %351 = vmatprep.mubr.bf16.mxu0 0
    %352 = vmatmul.mubr.bf16.gmra.mrb[0].mxu0 %v317
    %v353 = vpop.f32.mrb[0].mxu0
    %v354 = vadd.f32 %v302, %v353
    %v355 = vpop.f32.mrb[0].mxu0
    %v356 = vpop.f32.mrb[0].mxu0
    %v357 = vadd.f32 %v302, %v356
    %v358 = vpop.f32.mrb[0].mxu0
    %359 = vdwg.mxu0
    %v360 = vmax.f32 %v354, 0.0
    %v361 = vmax.f32 %v357, 0.0
    %v362 = vld [vmem:[#allocation13] sm:$0xff]
    %v363 = vld [vmem:[#allocation13 + $0x8] sm:$0xff]
    %v364 = vpack.c.bf16 %v361, %v360
    %v365 = vld [vmem:[#allocation14] sm:$0xff]
    %v366 = vld [vmem:[#allocation14 + $0x8] sm:$0xff]
    %v367 = vld [vmem:[#allocation14 + $0x10] sm:$0xff]
    %v368 = vld [vmem:[#allocation14 + $0x18] sm:$0xff]
    %v373 = vunpack.c.l.b16 %v365
    %v374 = vunpack.c.h.b16 %v365
    %v375 = vunpack.c.l.b16 %v366
    %v376 = vunpack.c.h.b16 %v366
    %v377 = vunpack.c.l.b16 %v367
    %v378 = vunpack.c.h.b16 %v367
    %v379 = vunpack.c.l.b16 %v368
    %v380 = vunpack.c.h.b16 %v368
    %v381 = vpack.c.b16 %v375, %v373
    %v382 = vpack.c.b16 %v376, %v374
    %v383 = vpack.c.b16 %v379, %v377
    %v384 = vpack.c.b16 %v380, %v378
    %v390 = vsel %vm243, %v364, 0
    %392 = vmatprep.subr.bf16.mxu0 %v382
    %393 = vmatpush1.bf16.msra.mxu0 %v381
    %394 = vmatprep.subr.bf16.mxu0 %v384
    %395 = vmatpush1.bf16.msra.mxu0 %v383
    %396 = vmatprep.subr.bf16.mxu0 0
    %397 = vmatpush1.bf16.msra.mxu0 0
    %398 = vmatprep.subr.bf16.mxu0 0
    %399 = vmatpush1.bf16.msra.mxu0 0
    %400 = vmatprep.subr.bf16.mxu0 0
    %401 = vmatpush1.bf16.msra.mxu0 0
    %402 = vmatprep.subr.bf16.mxu0 0
    %403 = vmatpush1.bf16.msra.mxu0 0
    %404 = vmatprep.subr.bf16.mxu0 0
    %405 = vmatpush1.bf16.msra.mxu0 0
    %406 = vmatprep.subr.bf16.mxu0 0
    %407 = vmatpush1.bf16.msra.mxu0 0
    %408 = vmatprep.subr.bf16.mxu0 0
    %409 = vmatpush1.bf16.msra.mxu0 0
    %410 = vmatprep.subr.bf16.mxu0 0
    %411 = vmatpush1.bf16.msra.mxu0 0
    %412 = vmatprep.subr.bf16.mxu0 0
    %413 = vmatpush1.bf16.msra.mxu0 0
    %414 = vmatprep.subr.bf16.mxu0 0
    %415 = vmatpush1.bf16.msra.mxu0 0
    %416 = vmatprep.subr.bf16.mxu0 0
    %417 = vmatpush1.bf16.msra.mxu0 0
    %418 = vmatprep.subr.bf16.mxu0 0
    %419 = vmatpush1.bf16.msra.mxu0 0
    %420 = vmatprep.subr.bf16.mxu0 0
    %421 = vmatpush1.bf16.msra.mxu0 0
    %422 = vmatprep.subr.bf16.mxu0 0
    %423 = vmatpush1.bf16.msra.mxu0 0
    %424 = vmatprep.mubr.bf16.mxu0 0
    %425 = vmatmul.mubr.bf16.gmra.mrb[0].mxu0 %v390
    %v426 = vpop.f32.mrb[0].mxu0
    %v427 = vadd.f32 0.0, %v426
    %v428 = vpop.f32.mrb[0].mxu0
    %v429 = vadd.f32 0.0, %v428
    %v430 = vpop.f32.mrb[0].mxu0
    %v431 = vadd.f32 0.0, %v430
    %v432 = vpop.f32.mrb[0].mxu0
    %v433 = vadd.f32 0.0, %v432
    %434 = vdwg.mxu0
    %v437 = vunpack.c.l.b16 %v362
    %v438 = vunpack.c.h.b16 %v362
    %v439 = vunpack.c.l.b16 %v363
    %v440 = vunpack.c.h.b16 %v363
    %v441 = vpack.c.b16 %v439, %v437
    %v442 = vpack.c.b16 %v440, %v438
    %445 = vmatprep.subr.bf16.mxu0 %v442
    %446 = vmatpush1.bf16.msra.mxu0 %v441
    %447 = vmatprep.subr.bf16.mxu0 0
    %448 = vmatpush1.bf16.msra.mxu0 0
    %449 = vmatprep.subr.bf16.mxu0 0
    %450 = vmatpush1.bf16.msra.mxu0 0
    %451 = vmatprep.subr.bf16.mxu0 0
    %452 = vmatpush1.bf16.msra.mxu0 0
    %453 = vmatprep.subr.bf16.mxu0 0
    %454 = vmatpush1.bf16.msra.mxu0 0
    %455 = vmatprep.subr.bf16.mxu0 0
    %456 = vmatpush1.bf16.msra.mxu0 0
    %457 = vmatprep.subr.bf16.mxu0 0
    %458 = vmatpush1.bf16.msra.mxu0 0
    %459 = vmatprep.subr.bf16.mxu0 0
    %460 = vmatpush1.bf16.msra.mxu0 0
    %461 = vmatprep.subr.bf16.mxu0 0
    %462 = vmatpush1.bf16.msra.mxu0 0
    %463 = vmatprep.subr.bf16.mxu0 0
    %464 = vmatpush1.bf16.msra.mxu0 0
    %465 = vmatprep.subr.bf16.mxu0 0
    %466 = vmatpush1.bf16.msra.mxu0 0
    %467 = vmatprep.subr.bf16.mxu0 0
    %468 = vmatpush1.bf16.msra.mxu0 0
    %469 = vmatprep.subr.bf16.mxu0 0
    %470 = vmatpush1.bf16.msra.mxu0 0
    %471 = vmatprep.subr.bf16.mxu0 0
    %472 = vmatpush1.bf16.msra.mxu0 0
    %473 = vmatprep.subr.bf16.mxu0 0
    %474 = vmatpush1.bf16.msra.mxu0 0
    %475 = vmatprep.subr.bf16.mxu0 0
    %476 = vmatpush1.bf16.msra.mxu0 0
    %477 = vmatprep.mubr.bf16.mxu0 0
    %478 = vmatmul.mubr.bf16.gmra.mrb[0].mxu0 %v176
    %v479 = vpop.f32.mrb[0].mxu0
    %v480 = vadd.f32 %v427, %v479
    %v481 = vpop.f32.mrb[0].mxu0
    %v482 = vadd.f32 %v429, %v481
    %v483 = vpop.f32.mrb[0].mxu0
    %v484 = vadd.f32 %v431, %v483
    %v485 = vpop.f32.mrb[0].mxu0
    %v486 = vadd.f32 %v433, %v485
    %487 = vdwg.mxu0
    %v488 = vld [vmem:[#allocation16] sm:$0x3]
    %v490 = vlaneseq
    %v491 = vshrl.u32 %v490, 7
    %v492 = vsub.s32 0, %v491
    %v493 = vrot.slane %v488, %v492
    %v494 = vlaneseq
    %v495 = vshrl.u32 %v494, 7
    %v496 = vsub.s32 1, %v495
    %v497 = vrot.slane %v488, %v496
    %v500 = vadd.f32 %v480, %v493
    %v501 = vadd.f32 %v482, %v497
    %v502 = vadd.f32 %v484, %v493
    %v503 = vadd.f32 %v486, %v497
    %v504 = vmul.f32 %v501, 0.5
    %v505 = vmul.f32 %v503, 0.5
    %v506 = vmul.f32 %v504, 1.442695
    %v507 = vpow.pop %v506
    %v508 = vmul.f32 %v505, 1.442695
    %v509 = vpow.pop %v508
    %v510 = vld [vmem:[#allocation5] sm:$0xff]
    %v511 = vld [vmem:[#allocation5 + $0x8] sm:$0xff]
    %v512 = vmul.f32 %v510, %v507
    %v513 = vmul.f32 %v511, %v509
    %v514 = vadd.f32 %v512, %v500
    %v515 = vadd.f32 %v513, %v502
    %516 = vst [vmem:[#allocation17] sm:$0xff] %v500
    %517 = vst [vmem:[#allocation17 + $0x20] sm:$0xff] %v502
    %518 = vst [vmem:[#allocation17 + $0x8] sm:$0xff] %v507
    %519 = vst [vmem:[#allocation17 + $0x28] sm:$0xff] %v509
    %520 = vst [vmem:[#allocation17 + $0x10] sm:$0xff] %v501
    %521 = vst [vmem:[#allocation17 + $0x30] sm:$0xff] %v503
    %522 = vst [vmem:[#allocation17 + $0x18] sm:$0xff] %v514
    %523 = vst [vmem:[#allocation17 + $0x38] sm:$0xff] %v515
    // Predicated region
    $region74: #{tpu_custom_call.1} parent=1 // pred_check
      _
    $region75: #{tpu_custom_call.1} parent=1 // pred_check_branch
      %525 = sbr.rel (0) target = $region77
    $region76: #{tpu_custom_call.1} parent=1 // pred_region
      %s527 = ssub.s32 1024, 1024
      %528 = vsyncadd [#allocation4], %s527
      %s529 = sshll.u32 [#allocation17], 4
      %s530 = int_to_ptr.vmem [resolvable:$true] %s529
      %535 = dma.vmem_to_hbm [thread:$0]  %s530, 1024, %s9, [#allocation4], 512, 512, 32
    $region77: #{tpu_custom_call.1} parent=1 // pred_fallthru
      _
    // Predicated region
    $region78: #{tpu_custom_call.1} parent=1 // pred_check
      _
    $region79: #{tpu_custom_call.1} parent=1 // pred_check_branch
      %537 = sbr.rel (0) target = $region81
    $region80: #{tpu_custom_call.1} parent=1 // pred_region
      %538 = dma.done [#allocation4], 1024
    $region81: #{tpu_custom_call.1} parent=1 // pred_fallthru
      _
    %539 = vsyncpa [#allocation3], 1
    %540 = vsyncpa [#allocation6], 1
    %541 = vsyncpa [#allocation9], 1
    %542 = vsyncpa [#allocation12], 1
    %543 = vsyncpa [#allocation15], 1
    %544 = vsyncpa [#allocation4], 1

</llo_original>
